<compile_context>
chip_gen: v6e
topology: v6e:2x2x1
jax: 0.10.0
libtpu: 0.0.40
codegen_flags: <defaults>
</compile_context>

<pallas_src>
import functools

import jax
import jax.numpy as jnp
import numpy as np
from jax.experimental import pallas as pl
from jax.experimental.pallas import tpu as pltpu

_TM_MAX = 256  # sublane rows per grid step (256*128 = 32768 boxes/step)


def _round_up(x, m):
    return ((x + m - 1) // m) * m


def _tiling(n):
    """Pick (tm, m): sublane tile and padded row count (rows of 128 boxes)."""
    m0 = max((n + 127) // 128, 1)   # rows of 128 boxes needed
    m8 = max(_round_up(m0, 8), 8)   # round to full (8,128) vregs
    if m8 <= 16:
        tm = m8                     # tiny input: single small step
    elif m8 <= 2 * _TM_MAX:
        # split roughly in half -> >=2 parallel grid steps (v7x megacore)
        tm = _round_up((m8 + 1) // 2, 8)
    else:
        tm = _TM_MAX
    m = _round_up(m8, tm)
    return tm, m


def _iou_loss_kernel(pred_ref, tgt_ref, out_ref, *, loss_type):
    p = pred_ref[...]  # (4, TM, 128)
    t = tgt_ref[...]   # (4, TM, 128)

    px, py, pw, ph = p[0], p[1], p[2], p[3]   # each (TM, 128)
    tx, ty, tw, th = t[0], t[1], t[2], t[3]

    # Half-extents hoisted once and reused for both the intersection and
    # (in the giou branch) the enclosing box.
    pw_h = pw * 0.5
    ph_h = ph * 0.5
    tw_h = tw * 0.5
    th_h = th * 0.5

    p_l = px - pw_h
    p_r = px + pw_h
    p_t = py - ph_h
    p_b = py + ph_h
    t_l = tx - tw_h
    t_r = tx + tw_h
    t_t = ty - th_h
    t_b = ty + th_h

    # intersection top-left / bottom-right
    tl_x = jnp.maximum(p_l, t_l)
    tl_y = jnp.maximum(p_t, t_t)
    br_x = jnp.minimum(p_r, t_r)
    br_y = jnp.minimum(p_b, t_b)

    area_p = pw * ph
    area_g = tw * th

    valid = (tl_x < br_x) & (tl_y < br_y)
    area_i = jnp.where(valid, (br_x - tl_x) * (br_y - tl_y), 0.0)

    # exact reciprocal keeps the 1e-5 tolerance (approx vrcp is too coarse)
    iou = area_i * pl.reciprocal(area_p + area_g - area_i + 1e-16, approx=False)

    if loss_type == "iou":
        loss = 1.0 - iou * iou
    elif loss_type == "giou":
        c_w = jnp.maximum(p_r, t_r) - jnp.minimum(p_l, t_l)
        c_h = jnp.maximum(p_b, t_b) - jnp.minimum(p_t, t_t)
        area_c = c_w * c_h
        giou = iou - (area_c - area_i) * pl.reciprocal(
            jnp.maximum(area_c, 1e-16), approx=False)
        loss = 1.0 - jnp.clip(giou, -1.0, 1.0)
    else:
        raise ValueError(f"unknown loss_type: {loss_type}")

    out_ref[...] = loss


def iou_loss(pred, target, reduction="none", loss_type="iou"):
    """Pallas port of YOLOX IOUloss.forward."""
    assert pred.shape[0] == target.shape[0]
    pred = pred.reshape(-1, 4).astype(jnp.float32)
    target = target.reshape(-1, 4).astype(jnp.float32)
    n = pred.shape[0]

    tm, m = _tiling(n)
    n_pad = m * 128

    def prep(x):
        xt = x.T  # (4, n)
        if n_pad != n:
            xt = jnp.pad(xt, ((0, 0), (0, n_pad - n)))
        return xt.reshape(4, m, 128)

    pred_t = prep(pred)
    tgt_t = prep(target)

    kernel = functools.partial(_iou_loss_kernel, loss_type=loss_type)

    out = pl.pallas_call(
        kernel,
        out_shape=jax.ShapeDtypeStruct((m, 128), jnp.float32),
        grid_spec=pltpu.PrefetchScalarGridSpec(
            num_scalar_prefetch=0,
            grid=(m // tm,),
            in_specs=[
                pl.BlockSpec((4, tm, 128), lambda i: (0, i, 0)),
                pl.BlockSpec((4, tm, 128), lambda i: (0, i, 0)),
            ],
            out_specs=pl.BlockSpec((tm, 128), lambda i: (i, 0)),
        ),
        compiler_params=pltpu.CompilerParams(
            dimension_semantics=("parallel",),
        ),
    )(pred_t, tgt_t)

    loss = out.reshape(n_pad)[:n]  # drop padding

    # Reduction over the per-box loss vector; kept in plain JAX glue.
    if reduction == "mean":
        loss = loss.mean()
    elif reduction == "sum":
        loss = loss.sum()
    return loss


def _iou_loss_ref(pred, target, reduction="none", loss_type="iou"):
    """Pure-JAX reference (mirrors the PyTorch module)."""
    pred = pred.reshape(-1, 4).astype(jnp.float32)
    target = target.reshape(-1, 4).astype(jnp.float32)
    tl = jnp.maximum(pred[:, :2] - pred[:, 2:] / 2, target[:, :2] - target[:, 2:] / 2)
    br = jnp.minimum(pred[:, :2] + pred[:, 2:] / 2, target[:, :2] + target[:, 2:] / 2)
    area_p = jnp.prod(pred[:, 2:], 1)
    area_g = jnp.prod(target[:, 2:], 1)
    en = (tl < br).astype(jnp.float32).prod(axis=1)
    area_i = jnp.prod(br - tl, 1) * en
    iou = area_i / (area_p + area_g - area_i + 1e-16)
    if loss_type == "iou":
        loss = 1.0 - iou ** 2
    elif loss_type == "giou":
        c_tl = jnp.minimum(pred[:, :2] - pred[:, 2:] / 2, target[:, :2] - target[:, 2:] / 2)
        c_br = jnp.maximum(pred[:, :2] + pred[:, 2:] / 2, target[:, :2] + target[:, 2:] / 2)
        area_c = jnp.prod(c_br - c_tl, 1)
        giou = iou - (area_c - area_i) / jnp.maximum(area_c, 1e-16)
        loss = 1.0 - jnp.clip(giou, -1.0, 1.0)
    if reduction == "mean":
        loss = loss.mean()
    elif reduction == "sum":
        loss = loss.sum()
    return loss


def _make_boxes(key, n_boxes):
    k1, k2, k3, k4 = jax.random.split(key, 4)
    pred = jnp.concatenate(
        [jax.random.uniform(k1, (n_boxes, 2)) * 10.0,
         jax.random.uniform(k2, (n_boxes, 2)) * 4.0 + 0.5], axis=1)
    target = jnp.concatenate(
        [jax.random.uniform(k3, (n_boxes, 2)) * 10.0,
         jax.random.uniform(k4, (n_boxes, 2)) * 4.0 + 0.5], axis=1)
    return pred, target


if __name__ == "__main__":
    # IOUloss has no learnable parameters — nothing to initialize.
    key = jax.random.PRNGKey(0)
    ka, kb = jax.random.split(key)

    ok = True
    # n=16 exercises the single-step tiny path; n=2304 exercises the
    # multi-step (parallel grid) path with padding.
    for case_key, n_boxes in ((ka, 16), (kb, 2304)):
        pred, target = _make_boxes(case_key, n_boxes)
        for loss_type in ("iou", "giou"):
            for reduction in ("none", "mean", "sum"):
                out = iou_loss(pred, target, reduction=reduction, loss_type=loss_type)
                out = jax.block_until_ready(out)
                ref = _iou_loss_ref(pred, target, reduction=reduction, loss_type=loss_type)
                if not np.allclose(np.asarray(out), np.asarray(ref),
                                   rtol=1e-5, atol=1e-5):
                    ok = False

    if ok:
        print("KERNEL_OK")
</pallas_src>

<mosaic_0001>
module attributes {stable_mosaic.version = 11 : i64} {
  func.func @_iou_loss_kernel(%arg0: i32, %arg1: memref<4x8x128xf32, #tpu.memory_space<vmem>>, %arg2: memref<4x8x128xf32, #tpu.memory_space<vmem>>, %arg3: memref<8x128xf32, #tpu.memory_space<vmem>>) attributes {dimension_semantics = [#tpu.dimension_semantics<parallel>], iteration_bounds = array<i64: 1>, scalar_prefetch = 0 : i64, scratch_operands = 0 : i64, tpu.core_type = #tpu.core_type<tc>, window_params = [{transform_indices = @transform_0, window_bounds = array<i64: 4, 8, 128>}, {transform_indices = @transform_1, window_bounds = array<i64: 4, 8, 128>}, {transform_indices = @transform_2, window_bounds = array<i64: 8, 128>}]} {
    %c0 = arith.constant 0 : index
    %c0_0 = arith.constant 0 : index
    %c0_1 = arith.constant 0 : index
    %0 = vector.load %arg1[%c0, %c0_0, %c0_1] : memref<4x8x128xf32, #tpu.memory_space<vmem>>, vector<4x8x128xf32>
    %c0_2 = arith.constant 0 : index
    %c0_3 = arith.constant 0 : index
    %c0_4 = arith.constant 0 : index
    %1 = vector.load %arg2[%c0_2, %c0_3, %c0_4] : memref<4x8x128xf32, #tpu.memory_space<vmem>>, vector<4x8x128xf32>
    %2 = vector.extract_strided_slice %0 {offsets = [0, 0, 0], sizes = [1, 8, 128], strides = [1, 1, 1]} : vector<4x8x128xf32> to vector<1x8x128xf32>
    %3 = vector.shape_cast %2 : vector<1x8x128xf32> to vector<8x128xf32>
    %4 = vector.extract_strided_slice %0 {offsets = [1, 0, 0], sizes = [1, 8, 128], strides = [1, 1, 1]} : vector<4x8x128xf32> to vector<1x8x128xf32>
    %5 = vector.shape_cast %4 : vector<1x8x128xf32> to vector<8x128xf32>
    %6 = vector.extract_strided_slice %0 {offsets = [2, 0, 0], sizes = [1, 8, 128], strides = [1, 1, 1]} : vector<4x8x128xf32> to vector<1x8x128xf32>
    %7 = vector.shape_cast %6 : vector<1x8x128xf32> to vector<8x128xf32>
    %8 = vector.extract_strided_slice %0 {offsets = [3, 0, 0], sizes = [1, 8, 128], strides = [1, 1, 1]} : vector<4x8x128xf32> to vector<1x8x128xf32>
    %9 = vector.shape_cast %8 : vector<1x8x128xf32> to vector<8x128xf32>
    %10 = vector.extract_strided_slice %1 {offsets = [0, 0, 0], sizes = [1, 8, 128], strides = [1, 1, 1]} : vector<4x8x128xf32> to vector<1x8x128xf32>
    %11 = vector.shape_cast %10 : vector<1x8x128xf32> to vector<8x128xf32>
    %12 = vector.extract_strided_slice %1 {offsets = [1, 0, 0], sizes = [1, 8, 128], strides = [1, 1, 1]} : vector<4x8x128xf32> to vector<1x8x128xf32>
    %13 = vector.shape_cast %12 : vector<1x8x128xf32> to vector<8x128xf32>
    %14 = vector.extract_strided_slice %1 {offsets = [2, 0, 0], sizes = [1, 8, 128], strides = [1, 1, 1]} : vector<4x8x128xf32> to vector<1x8x128xf32>
    %15 = vector.shape_cast %14 : vector<1x8x128xf32> to vector<8x128xf32>
    %16 = vector.extract_strided_slice %1 {offsets = [3, 0, 0], sizes = [1, 8, 128], strides = [1, 1, 1]} : vector<4x8x128xf32> to vector<1x8x128xf32>
    %17 = vector.shape_cast %16 : vector<1x8x128xf32> to vector<8x128xf32>
    %cst = arith.constant 5.000000e-01 : f32
    %18 = vector.broadcast %cst : f32 to vector<8x128xf32>
    %19 = arith.mulf %7, %18 : vector<8x128xf32>
    %cst_5 = arith.constant 5.000000e-01 : f32
    %20 = vector.broadcast %cst_5 : f32 to vector<8x128xf32>
    %21 = arith.mulf %9, %20 : vector<8x128xf32>
    %cst_6 = arith.constant 5.000000e-01 : f32
    %22 = vector.broadcast %cst_6 : f32 to vector<8x128xf32>
    %23 = arith.mulf %15, %22 : vector<8x128xf32>
    %cst_7 = arith.constant 5.000000e-01 : f32
    %24 = vector.broadcast %cst_7 : f32 to vector<8x128xf32>
    %25 = arith.mulf %17, %24 : vector<8x128xf32>
    %26 = arith.subf %3, %19 : vector<8x128xf32>
    %27 = arith.addf %3, %19 : vector<8x128xf32>
    %28 = arith.subf %5, %21 : vector<8x128xf32>
    %29 = arith.addf %5, %21 : vector<8x128xf32>
    %30 = arith.subf %11, %23 : vector<8x128xf32>
    %31 = arith.addf %11, %23 : vector<8x128xf32>
    %32 = arith.subf %13, %25 : vector<8x128xf32>
    %33 = arith.addf %13, %25 : vector<8x128xf32>
    %34 = arith.maximumf %26, %30 : vector<8x128xf32>
    %35 = arith.maximumf %28, %32 : vector<8x128xf32>
    %36 = arith.minimumf %27, %31 : vector<8x128xf32>
    %37 = arith.minimumf %29, %33 : vector<8x128xf32>
    %38 = arith.mulf %7, %9 : vector<8x128xf32>
    %39 = arith.mulf %15, %17 : vector<8x128xf32>
    %40 = arith.cmpf olt, %34, %36 : vector<8x128xf32>
    %41 = arith.cmpf olt, %35, %37 : vector<8x128xf32>
    %42 = arith.andi %40, %41 : vector<8x128xi1>
    %43 = arith.subf %36, %34 : vector<8x128xf32>
    %44 = arith.subf %37, %35 : vector<8x128xf32>
    %45 = arith.mulf %43, %44 : vector<8x128xf32>
    %cst_8 = arith.constant 0.000000e+00 : f32
    %46 = vector.broadcast %cst_8 : f32 to vector<8x128xf32>
    %47 = arith.select %42, %45, %46 : vector<8x128xi1>, vector<8x128xf32>
    %48 = arith.addf %38, %39 : vector<8x128xf32>
    %49 = arith.subf %48, %47 : vector<8x128xf32>
    %cst_9 = arith.constant 1.000000e-16 : f32
    %50 = vector.broadcast %cst_9 : f32 to vector<8x128xf32>
    %51 = arith.addf %49, %50 : vector<8x128xf32>
    %52 = tpu.reciprocal %51 : vector<8x128xf32> -> vector<8x128xf32>
    %53 = arith.mulf %47, %52 : vector<8x128xf32>
    %54 = arith.mulf %53, %53 : vector<8x128xf32>
    %cst_10 = arith.constant 1.000000e+00 : f32
    %55 = vector.broadcast %cst_10 : f32 to vector<8x128xf32>
    %56 = arith.subf %55, %54 : vector<8x128xf32>
    %c0_11 = arith.constant 0 : index
    %c0_12 = arith.constant 0 : index
    %57 = vector.load %arg3[%c0_11, %c0_12] : memref<8x128xf32, #tpu.memory_space<vmem>>, vector<8x128xf32>
    tpu.vector_store %arg3[%c0_11, %c0_12], %56 {strides = array<i32>} : memref<8x128xf32, #tpu.memory_space<vmem>>, vector<8x128xf32>,
    return
  }
  func.func @transform_0(%arg0: i32) -> (i32, i32, i32) {
    %c0_i32 = arith.constant 0 : i32
    %c0_i32_0 = arith.constant 0 : i32
    %c0_i32_1 = arith.constant 0 : i32
    return %c0_i32, %arg0, %c0_i32_0 : i32, i32, i32
  }
  func.func @transform_1(%arg0: i32) -> (i32, i32, i32) {
    %c0_i32 = arith.constant 0 : i32
    %c0_i32_0 = arith.constant 0 : i32
    %c0_i32_1 = arith.constant 0 : i32
    return %c0_i32, %arg0, %c0_i32_0 : i32, i32, i32
  }
  func.func @transform_2(%arg0: i32) -> (i32, i32) {
    %c0_i32 = arith.constant 0 : i32
    %c0_i32_0 = arith.constant 0 : i32
    return %arg0, %c0_i32 : i32, i32
  }
}

</mosaic_0001>

<llo_original>
// kernel: tpu_custom_call.1
$region0: #{tpu_custom_call.1}
  #allocation0 [shape = 'u32[]', space=smem, size = 0x4, offset = 0x4, fixed_abs, tag = 'smem constant byte address 0x4 - core index']
  #allocation1 [shape = 'u32[144,128]{1,0:T(1,128)}', space=vmem, size = 0x12000, scoped, tag = 'internal scratch']
  %s0 = inlined_call_operand.hbm [shape: f32[4,8,128], index: 0, kind: input, shape index: {}]
  %s1 = inlined_call_operand.hbm [shape: f32[4,8,128], index: 1, kind: input, shape index: {}]
  %s2 = inlined_call_operand.hbm [shape: f32[8,128], index: 2, kind: output, shape index: {}]
  %s3 = sld [smem:[#allocation0]]
  $region26: #{tpu_custom_call.1} parent=0
    _
  %s5 = ssub.s32 1, %s3
  %s6 = scalar_select 0, %s5, %s3
  $region1: #{tpu_custom_call.1} parent=0
    #allocation2 [shape = 'u8[16384]{0}', space=vmem, size = 0x4000, scoped, tag = 'input window, operand 0, single buffered']
    #allocation3 [shape = 's32[1]{0}', space=sflag, size = 0x4, scoped, tag = 'scoped memory for tpu_custom_call.1']
    #allocation4 [shape = 's32[1]{0}', space=sflag, size = 0x4, scoped, tag = 'scoped memory for tpu_custom_call.1']
    #allocation5 [shape = 'u8[16384]{0}', space=vmem, size = 0x4000, scoped, tag = 'input window, operand 1, single buffered']
    #allocation6 [shape = 's32[1]{0}', space=sflag, size = 0x4, scoped, tag = 'scoped memory for tpu_custom_call.1']
    #allocation7 [shape = 'u8[4096]{0}', space=vmem, size = 0x1000, scoped, tag = 'output window, operand 0, single buffered']
    %7 = vsyncpa [#allocation3], 0
    %8 = vsyncpa [#allocation6], 0
    %9 = vsyncpa [#allocation4], 0
    // Predicated region
    $region2: #{tpu_custom_call.1} parent=1 // pred_check
      _
    $region3: #{tpu_custom_call.1} parent=1 // pred_check_branch
      %11 = sbr.rel (0) target = $region5
    $region4: #{tpu_custom_call.1} parent=1 // pred_region
      %s13 = ssub.s32 512, 512
      %14 = vsyncadd [#allocation3], %s13
      %s15 = sshll.u32 [#allocation2], 4
      %s16 = int_to_ptr.vmem [resolvable:$true] %s15
      %21 = dma.hbm_to_vmem [thread:$0]  %s0, 512, %s16, [#allocation3], 128, 128, 8
    $region5: #{tpu_custom_call.1} parent=1 // pred_fallthru
      _
    // Predicated region
    $region6: #{tpu_custom_call.1} parent=1 // pred_check
      _
    $region7: #{tpu_custom_call.1} parent=1 // pred_check_branch
      %23 = sbr.rel (0) target = $region9
    $region8: #{tpu_custom_call.1} parent=1 // pred_region
      %s25 = ssub.s32 512, 512
      %26 = vsyncadd [#allocation6], %s25
      %s27 = sshll.u32 [#allocation5], 4
      %s28 = int_to_ptr.vmem [resolvable:$true] %s27
      %33 = dma.hbm_to_vmem [thread:$0]  %s1, 512, %s28, [#allocation6], 128, 128, 8
    $region9: #{tpu_custom_call.1} parent=1 // pred_fallthru
      _
    // Predicated region
    $region10: #{tpu_custom_call.1} parent=1 // pred_check
      _
    $region11: #{tpu_custom_call.1} parent=1 // pred_check_branch
      %35 = sbr.rel (0) target = $region13
    $region12: #{tpu_custom_call.1} parent=1 // pred_region
      %36 = dma.done [#allocation3], 512
    $region13: #{tpu_custom_call.1} parent=1 // pred_fallthru
      _
    // Predicated region
    $region14: #{tpu_custom_call.1} parent=1 // pred_check
      _
    $region15: #{tpu_custom_call.1} parent=1 // pred_check_branch
      %38 = sbr.rel (0) target = $region17
    $region16: #{tpu_custom_call.1} parent=1 // pred_region
      %39 = dma.done [#allocation6], 512
    $region17: #{tpu_custom_call.1} parent=1 // pred_fallthru
      _
    %v40 = vld [vmem:[#allocation2] sm:$0xff]
    %v41 = vld [vmem:[#allocation2 + $0x8] sm:$0xff]
    %v42 = vld [vmem:[#allocation2 + $0x10] sm:$0xff]
    %v43 = vld [vmem:[#allocation2 + $0x18] sm:$0xff]
    %v44 = vld [vmem:[#allocation5] sm:$0xff]
    %v45 = vld [vmem:[#allocation5 + $0x8] sm:$0xff]
    %v46 = vld [vmem:[#allocation5 + $0x10] sm:$0xff]
    %v47 = vld [vmem:[#allocation5 + $0x18] sm:$0xff]
    %v48 = vmul.f32 %v42, 0.5
    %v49 = vmul.f32 %v43, 0.5
    %v50 = vmul.f32 %v46, 0.5
    %v51 = vmul.f32 %v47, 0.5
    %v52 = vsub.f32 %v40, %v48
    %v53 = vadd.f32 %v40, %v48
    %v54 = vsub.f32 %v41, %v49
    %v55 = vadd.f32 %v41, %v49
    %v56 = vsub.f32 %v44, %v50
    %v57 = vadd.f32 %v44, %v50
    %v58 = vsub.f32 %v45, %v51
    %v59 = vadd.f32 %v45, %v51
    %v60 = vmax.f32 %v52, %v56
    %v61 = vmax.f32 %v54, %v58
    %v62 = vmin.f32 %v53, %v57
    %v63 = vmin.f32 %v55, %v59
    %v64 = vmul.f32 %v42, %v43
    %v65 = vmul.f32 %v46, %v47
    %vm66 = vcmp.lt.f32.partialorder %v60, %v62
    %vm67 = vcmp.lt.f32.partialorder %v61, %v63
    %vm68 = vmand %vm66, %vm67
    %v69 = vsub.f32 %v62, %v60
    %v70 = vsub.f32 %v63, %v61
    %v71 = vmul.f32 %v69, %v70
    %v72 = vsel %vm68, %v71, 0.0
    %v73 = vadd.f32 %v64, %v65
    %v74 = vsub.f32 %v73, %v72
    %v75 = vadd.f32 %v74, 1e-16
    %v76 = vrcp.pop %v75
    %v77 = vmul.f32 %v72, %v76
    %v78 = vmul.f32 %v77, %v77
    %v79 = vsub.f32 1.0, %v78
    %80 = vst [vmem:[#allocation7] sm:$0xff] %v79
    // Predicated region
    $region18: #{tpu_custom_call.1} parent=1 // pred_check
      _
    $region19: #{tpu_custom_call.1} parent=1 // pred_check_branch
      %82 = sbr.rel (0) target = $region21
    $region20: #{tpu_custom_call.1} parent=1 // pred_region
      %s84 = ssub.s32 128, 128
      %85 = vsyncadd [#allocation4], %s84
      %s87 = sshll.u32 [#allocation7], 4
      %s88 = int_to_ptr.vmem [resolvable:$true] %s87
      %90 = dma.vmem_to_hbm [thread:$0]  %s88, 128, %s2, [#allocation4]
    $region21: #{tpu_custom_call.1} parent=1 // pred_fallthru
      _
    // Predicated region
    $region22: #{tpu_custom_call.1} parent=1 // pred_check
      _
    $region23: #{tpu_custom_call.1} parent=1 // pred_check_branch
      %92 = sbr.rel (0) target = $region25
    $region24: #{tpu_custom_call.1} parent=1 // pred_region
      %93 = dma.done [#allocation4], 128
    $region25: #{tpu_custom_call.1} parent=1 // pred_fallthru
      _
    %94 = vsyncpa [#allocation3], 1
    %95 = vsyncpa [#allocation6], 1
    %96 = vsyncpa [#allocation4], 1

</llo_original>
